<compile_context>
chip_gen: v6e
topology: v6e:2x2x1
jax: 0.10.0
libtpu: 0.0.40
codegen_flags: <defaults>
</compile_context>

<pallas_src>
import jax
import jax.numpy as jnp
from jax.experimental import pallas as pl
from jax.experimental.pallas import tpu as pltpu

A_PAD = 128          # action lanes padded to a full vreg lane width
NEG_INF = -3.4e38    # torch.clamp(log(mask), min=-3.4e38) clamp value


def wrapper_kernel(obs_ref, w1_ref, b1_ref, w2_ref, b2_ref, mask_ref,
                   gumbel_ref, out_ref, acc_ref):
    """One (batch-tile, Din-tile) grid step.

    grid = (B//TB, Din//TK); the Din axis is last ("arbitrary") and reduced
    into the f32 accumulator scratch; the epilogue (relu -> 2nd matmul ->
    mask -> argmax / Gumbel-max sample) runs only at the last Din step.
    """
    k = pl.program_id(1)

    @pl.when(k == 0)
    def _init():
        acc_ref[...] = jnp.zeros_like(acc_ref)

    # ---- first linear, K-tiled: bf16 x bf16 on the MXU, f32 accumulation ----
    acc_ref[...] += jnp.dot(obs_ref[...].astype(jnp.bfloat16), w1_ref[...],
                            preferred_element_type=jnp.float32)

    @pl.when(k == pl.num_programs(1) - 1)
    def _finalize():
        h = jnp.maximum(acc_ref[...] + b1_ref[...], 0.0)             # (TB, H) f32
        # Tiny second matmul kept fully f32 (H x 128): no bf16 tie-breaking
        # drift on the argmax vs. an f32 reference.
        logits = jnp.dot(h, w2_ref[...],
                         preferred_element_type=jnp.float32) + b2_ref[...]

        # clamp(log(mask), min=-3.4e38) == where(mask > 0, 0, -3.4e38): one VPU
        # select instead of an EUP log on the epilogue critical path.  Padded
        # action lanes carry mask == 0 and can therefore never win.
        add_mask = jnp.where(mask_ref[...] > 0.0, jnp.float32(0.0),
                             jnp.float32(NEG_INF))
        masked = logits + add_mask                                    # (TB, 128)

        tb, a = masked.shape
        iota = jax.lax.broadcasted_iota(jnp.int32, (tb, a), 1)

        # det_action = argmax(softmax(masked)) == argmax(masked) (first max idx).
        m_max = jnp.max(masked, axis=-1, keepdims=True)
        det = jnp.min(jnp.where(masked >= m_max, iota, a), axis=-1, keepdims=True)

        # prob_action = multinomial(softmax(masked), 1) via Gumbel-max; masked /
        # padded lanes sit at ~-3.4e38 so bounded Gumbel noise can't elect them.
        noisy = masked + gumbel_ref[...]
        n_max = jnp.max(noisy, axis=-1, keepdims=True)
        samp = jnp.min(jnp.where(noisy >= n_max, iota, a), axis=-1, keepdims=True)

        # Lane-dense packed int32 output: lane0 = sample, lane1 = argmax.
        lane = jax.lax.broadcasted_iota(jnp.int32, out_ref.shape, 1)
        out_ref[...] = jnp.where(lane == 0, samp,
                                 jnp.where(lane == 1, det, 0)).astype(jnp.int32)


def _pick_tb(b_padded):
    """Batch tile: multiple of 8, <= 128, and >= 2 tiles once the batch allows
    it (pipelines DMA/compute and shards across v7x's two TensorCores)."""
    # TODO(synk): raise the 128 cap to 256 on v6e (256-wide MXU, 128 MiB VMEM).
    if b_padded <= 16:
        return b_padded
    target = max(8, min(128, (b_padded // 2) // 8 * 8))
    for tb in range(target, 7, -8):
        if b_padded % tb == 0:
            return tb
    return 8


def _pick_tk(d_in, cap=4096):
    """Din tile: largest multiple of 128 that divides d_in and is <= cap
    (falls back to the full d_in)."""
    best = None
    t = 128
    while t <= min(d_in, cap):
        if d_in % t == 0:
            best = t
        t += 128
    return best if best is not None else d_in


def prepare_params(raw_params):
    """One-time conversion of the inner VisualQNetwork parameters:
      * w1 -> bfloat16 (halves the dominant HBM transfer; done ONCE, not per call)
      * w2 / b2 -> f32, zero-padded from A to 128 lanes
      * b1 -> f32 row vector
    """
    w1, b1, w2, b2 = raw_params
    d_in, h = w1.shape
    n_act = w2.shape[1]
    # TODO(synk): for v5e/v6e quantize w1 to int8 (per-output-channel scales);
    # on v7x (no integer MXU path) use fp8 e4m3 instead -> halves w1 HBM traffic.
    w1_bf = jnp.asarray(w1, jnp.bfloat16)
    b1_f = jnp.asarray(b1, jnp.float32).reshape(1, h)
    w2_p = jnp.pad(jnp.asarray(w2, jnp.float32), ((0, 0), (0, A_PAD - n_act)))
    b2_p = jnp.pad(jnp.asarray(b2, jnp.float32).reshape(1, n_act),
                   ((0, 0), (0, A_PAD - n_act)))
    return (w1_bf, b1_f, w2_p, b2_p, n_act)


def wrapper_model_forward(obs_0, mask, prepared_params, discrete_output_sizes,
                          key=None, tb=None, tk=None):
    """Reproduces WrapperModel.forward.

    Returns ([prob_action], [det_action], discrete_shape, version_number,
    memory_size); prob_action / det_action are (B, 1) int32.
    """
    if key is None:
        key = jax.random.PRNGKey(0)

    w1_bf, b1_f, w2_p, b2_p, n_act = prepared_params
    d_in, h = w1_bf.shape
    assert n_act <= A_PAD

    b = obs_0.shape[0]
    assert mask.shape == (b, n_act)
    obs_flat = obs_0.reshape(b, -1).astype(jnp.float32)   # NCHW -> (B, C*H*W)
    assert obs_flat.shape[1] == d_in

    # Pad batch to a sublane-friendly multiple of 8 (padded rows sliced off).
    bp = -(-b // 8) * 8
    pad_rows = bp - b
    if pad_rows:
        obs_flat = jnp.pad(obs_flat, ((0, pad_rows), (0, 0)))
    # Pad actions to 128 lanes with mask==0 (-> -3.4e38 additive mask in-kernel).
    mask_p = jnp.pad(mask.astype(jnp.float32),
                     ((0, pad_rows), (0, A_PAD - n_act)))

    # Gumbel noise for multinomial sampling (outside the kernel: no in-kernel
    # PRNG lowering issues; padded lanes can never win regardless of noise).
    u = jax.random.uniform(key, (bp, A_PAD), jnp.float32,
                           minval=jnp.float32(1e-7), maxval=jnp.float32(1.0))
    gumbel = -jnp.log(-jnp.log(u))

    tb = _pick_tb(bp) if tb is None else tb
    tk = _pick_tk(d_in) if tk is None else tk
    assert bp % tb == 0 and d_in % tk == 0
    grid = (bp // tb, d_in // tk)

    # Explicit VMEM budget: double-buffered obs/w1 tiles + small epilogue blocks.
    vmem_est = (2 * tb * tk * 4 + 2 * tk * h * 2          # obs, w1 (pipelined)
                + h * A_PAD * 4 + h * 4 + A_PAD * 4       # w2, b1, b2
                + 3 * 2 * tb * A_PAD * 4                  # mask, gumbel, out
                + tb * h * 4)                             # accumulator scratch
    vmem_limit = int(min(48 * 1024 * 1024, max(2 * vmem_est, 16 * 1024 * 1024)))

    packed = pl.pallas_call(
        wrapper_kernel,
        out_shape=jax.ShapeDtypeStruct((bp, A_PAD), jnp.int32),
        grid=grid,
        in_specs=[
            pl.BlockSpec((tb, tk), lambda i, k: (i, k)),     # obs    (f32)
            pl.BlockSpec((tk, h), lambda i, k: (k, 0)),      # w1     (bf16)
            pl.BlockSpec((1, h), lambda i, k: (0, 0)),       # b1     (f32)
            pl.BlockSpec((h, A_PAD), lambda i, k: (0, 0)),   # w2     (f32, padded)
            pl.BlockSpec((1, A_PAD), lambda i, k: (0, 0)),   # b2     (f32, padded)
            pl.BlockSpec((tb, A_PAD), lambda i, k: (i, 0)),  # mask   (padded)
            pl.BlockSpec((tb, A_PAD), lambda i, k: (i, 0)),  # gumbel (padded)
        ],
        out_specs=pl.BlockSpec((tb, A_PAD), lambda i, k: (i, 0)),
        scratch_shapes=[pltpu.VMEM((tb, h), jnp.float32)],
        compiler_params=pltpu.CompilerParams(
            dimension_semantics=("parallel", "arbitrary"),
            vmem_limit_bytes=vmem_limit),
    )(obs_flat, w1_bf, b1_f, w2_p, b2_p, mask_p, gumbel)

    prob_action = packed[:b, 0:1]
    det_action = packed[:b, 1:2]

    # Constant "parameters" of the wrapper (requires_grad=False in torch).
    version_number = jnp.array([3.0], dtype=jnp.float32)
    memory_size = jnp.array([0.0], dtype=jnp.float32)
    discrete_shape = jnp.array([discrete_output_sizes], dtype=jnp.float32)

    return ([prob_action], [det_action], discrete_shape, version_number,
            memory_size)


def init_params(key, d_in, d_hidden, d_out):
    k1, k2, k3, k4 = jax.random.split(key, 4)
    w1 = jax.random.normal(k1, (d_in, d_hidden), jnp.float32) * 0.02
    b1 = jax.random.normal(k2, (1, d_hidden), jnp.float32) * 0.01
    w2 = jax.random.normal(k3, (d_hidden, d_out), jnp.float32) * 0.02
    b2 = jax.random.normal(k4, (1, d_out), jnp.float32) * 0.01
    return w1, b1, w2, b2


if __name__ == "__main__":
    key = jax.random.PRNGKey(0)
    k_obs, k_mask, k_par, k_samp = jax.random.split(key, 4)

    # Small shapes: batch=8, visual obs NCHW = (8, 4, 16, 16), hidden=128, 8 actions.
    B, C, Hs, Ws = 8, 4, 16, 16
    D_IN = C * Hs * Ws
    D_HID = 128
    N_ACT = 8
    discrete_output_sizes = [N_ACT]

    obs_0 = jax.random.normal(k_obs, (B, C, Hs, Ws), jnp.float32)
    # Action mask with some zeros; >= 1 valid action per row.
    mask = (jax.random.uniform(k_mask, (B, N_ACT)) > 0.3).astype(jnp.float32)
    mask = mask.at[:, 0].set(1.0)

    raw_params = init_params(k_par, D_IN, D_HID, N_ACT)
    params = prepare_params(raw_params)     # one-time bf16 / lane-padding prep

    # tk=512 forces a 2-step Din reduction to exercise the accumulator pipeline.
    out = wrapper_model_forward(obs_0, mask, params, discrete_output_sizes,
                                key=k_samp, tk=512)
    (prob_action_l, det_action_l, discrete_shape, version_number, memory_size) = out
    pa = jax.block_until_ready(prob_action_l[0])
    da = jax.block_until_ready(det_action_l[0])

    assert pa.shape == (B, 1) and da.shape == (B, 1)
    assert pa.dtype == jnp.int32 and da.dtype == jnp.int32
    assert bool(jnp.all((pa[:, 0] >= 0) & (pa[:, 0] < N_ACT)))
    assert bool(jnp.all((da[:, 0] >= 0) & (da[:, 0] < N_ACT)))

    # Sampled + argmax actions must be valid (masked-out actions have prob 0).
    row_idx = jnp.arange(B)
    assert bool(jnp.all(mask[row_idx, pa[:, 0]] > 0.0))
    assert bool(jnp.all(mask[row_idx, da[:, 0]] > 0.0))

    # det_action must hit the (near-)max of a plain-JAX reference computed with
    # the same bf16-rounded first-layer inputs (tolerance absorbs
    # accumulation-order / matmul-precision differences).
    w1, b1, w2, b2 = raw_params
    obs_flat = obs_0.reshape(B, -1)
    h_ref = jnp.maximum(
        jnp.dot(obs_flat.astype(jnp.bfloat16).astype(jnp.float32),
                w1.astype(jnp.bfloat16).astype(jnp.float32),
                precision=jax.lax.Precision.HIGHEST) + b1, 0.0)
    logits_ref = jnp.dot(h_ref, w2, precision=jax.lax.Precision.HIGHEST) + b2
    masked_ref = logits_ref + jnp.where(mask > 0.0, 0.0, -3.4e38)
    ref_max = jnp.max(masked_ref, axis=-1)
    assert bool(jnp.all(masked_ref[row_idx, da[:, 0]] >= ref_max - 1e-2))

    assert float(version_number[0]) == 3.0 and float(memory_size[0]) == 0.0

    print("KERNEL_OK")
</pallas_src>

<mosaic_0001>
module attributes {stable_mosaic.version = 11 : i64} {
  func.func @wrapper_kernel(%arg0: i32, %arg1: i32, %arg2: memref<8x512xf32, #tpu.memory_space<vmem>>, %arg3: memref<512x128xbf16, #tpu.memory_space<vmem>>, %arg4: memref<1x128xf32, #tpu.memory_space<vmem>>, %arg5: memref<128x128xf32, #tpu.memory_space<vmem>>, %arg6: memref<1x128xf32, #tpu.memory_space<vmem>>, %arg7: memref<8x128xf32, #tpu.memory_space<vmem>>, %arg8: memref<8x128xf32, #tpu.memory_space<vmem>>, %arg9: memref<8x128xi32, #tpu.memory_space<vmem>>, %arg10: memref<8x128xf32, #tpu.memory_space<vmem>>) attributes {dimension_semantics = [#tpu.dimension_semantics<parallel>, #tpu.dimension_semantics<arbitrary>], iteration_bounds = array<i64: 1, 2>, scalar_prefetch = 0 : i64, scratch_operands = 1 : i64, tpu.core_type = #tpu.core_type<tc>, window_params = [{transform_indices = @transform_0, window_bounds = array<i64: 8, 512>}, {transform_indices = @transform_1, window_bounds = array<i64: 512, 128>}, {pipeline_mode = #tpu.pipeline_mode<synchronous>, transform_indices = @transform_2, window_bounds = array<i64: 1, 128>}, {pipeline_mode = #tpu.pipeline_mode<synchronous>, transform_indices = @transform_3, window_bounds = array<i64: 128, 128>}, {pipeline_mode = #tpu.pipeline_mode<synchronous>, transform_indices = @transform_4, window_bounds = array<i64: 1, 128>}, {transform_indices = @transform_5, window_bounds = array<i64: 8, 128>}, {transform_indices = @transform_6, window_bounds = array<i64: 8, 128>}, {transform_indices = @transform_7, window_bounds = array<i64: 8, 128>}]} {
    %c0_i32 = arith.constant 0 : i32
    %0 = arith.cmpi eq, %arg1, %c0_i32 : i32
    %1 = arith.extui %0 : i1 to i32
    %c0_i32_0 = arith.constant 0 : i32
    %2 = arith.cmpi ne, %1, %c0_i32_0 : i32
    scf.if %2 {
      %cst_9 = arith.constant 0.000000e+00 : f32
      %13 = vector.broadcast %cst_9 : f32 to vector<8x128xf32>
      %c0_10 = arith.constant 0 : index
      %c0_11 = arith.constant 0 : index
      %14 = vector.load %arg10[%c0_10, %c0_11] : memref<8x128xf32, #tpu.memory_space<vmem>>, vector<8x128xf32>
      tpu.vector_store %arg10[%c0_10, %c0_11], %13 {strides = array<i32>} : memref<8x128xf32, #tpu.memory_space<vmem>>, vector<8x128xf32>,
    } else {
    }
    %c0 = arith.constant 0 : index
    %c0_1 = arith.constant 0 : index
    %3 = vector.load %arg10[%c0, %c0_1] : memref<8x128xf32, #tpu.memory_space<vmem>>, vector<8x128xf32>
    %c0_2 = arith.constant 0 : index
    %c0_3 = arith.constant 0 : index
    %4 = vector.load %arg2[%c0_2, %c0_3] : memref<8x512xf32, #tpu.memory_space<vmem>>, vector<8x512xf32>
    %5 = arith.truncf %4 : vector<8x512xf32> to vector<8x512xbf16>
    %c0_4 = arith.constant 0 : index
    %c0_5 = arith.constant 0 : index
    %6 = vector.load %arg3[%c0_4, %c0_5] : memref<512x128xbf16, #tpu.memory_space<vmem>>, vector<512x128xbf16>
    %cst = arith.constant dense<0.000000e+00> : vector<8x128xf32>
    %7 = tpu.matmul %5, %6, %cst {dimension_numbers = #tpu.dot_dimension_numbers<[1], [0], [0], [1], [0, 0, 1, 1], [], []>} : vector<8x512xbf16>, vector<512x128xbf16>, vector<8x128xf32> -> vector<8x128xf32>
    %8 = arith.addf %3, %7 : vector<8x128xf32>
    %c0_6 = arith.constant 0 : index
    %c0_7 = arith.constant 0 : index
    %9 = vector.load %arg10[%c0_6, %c0_7] : memref<8x128xf32, #tpu.memory_space<vmem>>, vector<8x128xf32>
    tpu.vector_store %arg10[%c0_6, %c0_7], %8 {strides = array<i32>} : memref<8x128xf32, #tpu.memory_space<vmem>>, vector<8x128xf32>,
    %c1_i32 = arith.constant 1 : i32
    %10 = arith.cmpi eq, %arg1, %c1_i32 : i32
    %11 = arith.extui %10 : i1 to i32
    %c0_i32_8 = arith.constant 0 : i32
    %12 = arith.cmpi ne, %11, %c0_i32_8 : i32
    scf.if %12 {
      %c0_9 = arith.constant 0 : index
      %c0_10 = arith.constant 0 : index
      %13 = vector.load %arg10[%c0_9, %c0_10] : memref<8x128xf32, #tpu.memory_space<vmem>>, vector<8x128xf32>
      %c0_11 = arith.constant 0 : index
      %c0_12 = arith.constant 0 : index
      %14 = vector.load %arg4[%c0_11, %c0_12] : memref<1x128xf32, #tpu.memory_space<vmem>>, vector<1x128xf32>
      %15 = vector.broadcast %14 : vector<1x128xf32> to vector<8x128xf32>
      %16 = arith.addf %13, %15 : vector<8x128xf32>
      %cst_13 = arith.constant 0.000000e+00 : f32
      %17 = vector.broadcast %cst_13 : f32 to vector<8x128xf32>
      %18 = arith.maximumf %16, %17 : vector<8x128xf32>
      %c0_14 = arith.constant 0 : index
      %c0_15 = arith.constant 0 : index
      %19 = vector.load %arg5[%c0_14, %c0_15] : memref<128x128xf32, #tpu.memory_space<vmem>>, vector<128x128xf32>
      %cst_16 = arith.constant dense<0.000000e+00> : vector<8x128xf32>
      %20 = tpu.matmul %18, %19, %cst_16 {dimension_numbers = #tpu.dot_dimension_numbers<[1], [0], [0], [1], [0, 0, 1, 1], [], []>} : vector<8x128xf32>, vector<128x128xf32>, vector<8x128xf32> -> vector<8x128xf32>
      %c0_17 = arith.constant 0 : index
      %c0_18 = arith.constant 0 : index
      %21 = vector.load %arg6[%c0_17, %c0_18] : memref<1x128xf32, #tpu.memory_space<vmem>>, vector<1x128xf32>
      %22 = vector.broadcast %21 : vector<1x128xf32> to vector<8x128xf32>
      %23 = arith.addf %20, %22 : vector<8x128xf32>
      %c0_19 = arith.constant 0 : index
      %c0_20 = arith.constant 0 : index
      %24 = vector.load %arg7[%c0_19, %c0_20] : memref<8x128xf32, #tpu.memory_space<vmem>>, vector<8x128xf32>
      %cst_21 = arith.constant 0.000000e+00 : f32
      %25 = vector.broadcast %cst_21 : f32 to vector<8x128xf32>
      %26 = arith.cmpf ogt, %24, %25 : vector<8x128xf32>
      %cst_22 = arith.constant 0.000000e+00 : f32
      %cst_23 = arith.constant -3.400000e+38 : f32
      %27 = vector.broadcast %cst_22 : f32 to vector<8x128xf32>
      %28 = vector.broadcast %cst_23 : f32 to vector<8x128xf32>
      %29 = arith.select %26, %27, %28 : vector<8x128xi1>, vector<8x128xf32>
      %30 = arith.addf %23, %29 : vector<8x128xf32>
      %31 = tpu.iota {dimensions = array<i32: 1>} : vector<8x128xi32>
      %cst_24 = arith.constant dense<0xFF800000> : vector<8xf32>
      %32 = vector.multi_reduction <maximumf>, %30, %cst_24 [1] : vector<8x128xf32> to vector<8xf32>
      %33 = vector.shape_cast %32 : vector<8xf32> to vector<8x1xf32>
      %34 = vector.broadcast %33 : vector<8x1xf32> to vector<8x128xf32>
      %35 = arith.cmpf oge, %30, %34 : vector<8x128xf32>
      %c128_i32 = arith.constant 128 : i32
      %36 = vector.broadcast %c128_i32 : i32 to vector<8x128xi32>
      %37 = arith.select %35, %31, %36 : vector<8x128xi1>, vector<8x128xi32>
      %cst_25 = arith.constant dense<2147483647> : vector<8xi32>
      %38 = vector.multi_reduction <minsi>, %37, %cst_25 [1] : vector<8x128xi32> to vector<8xi32>
      %39 = vector.shape_cast %38 : vector<8xi32> to vector<8x1xi32>
      %c0_26 = arith.constant 0 : index
      %c0_27 = arith.constant 0 : index
      %40 = vector.load %arg8[%c0_26, %c0_27] : memref<8x128xf32, #tpu.memory_space<vmem>>, vector<8x128xf32>
      %41 = arith.addf %30, %40 : vector<8x128xf32>
      %cst_28 = arith.constant dense<0xFF800000> : vector<8xf32>
      %42 = vector.multi_reduction <maximumf>, %41, %cst_28 [1] : vector<8x128xf32> to vector<8xf32>
      %43 = vector.shape_cast %42 : vector<8xf32> to vector<8x1xf32>
      %44 = vector.broadcast %43 : vector<8x1xf32> to vector<8x128xf32>
      %45 = arith.cmpf oge, %41, %44 : vector<8x128xf32>
      %c128_i32_29 = arith.constant 128 : i32
      %46 = vector.broadcast %c128_i32_29 : i32 to vector<8x128xi32>
      %47 = arith.select %45, %31, %46 : vector<8x128xi1>, vector<8x128xi32>
      %cst_30 = arith.constant dense<2147483647> : vector<8xi32>
      %48 = vector.multi_reduction <minsi>, %47, %cst_30 [1] : vector<8x128xi32> to vector<8xi32>
      %49 = vector.shape_cast %48 : vector<8xi32> to vector<8x1xi32>
      %50 = tpu.iota {dimensions = array<i32: 1>} : vector<8x128xi32>
      %c0_i32_31 = arith.constant 0 : i32
      %51 = vector.broadcast %c0_i32_31 : i32 to vector<8x128xi32>
      %52 = arith.cmpi eq, %50, %51 : vector<8x128xi32>
      %c1_i32_32 = arith.constant 1 : i32
      %53 = vector.broadcast %c1_i32_32 : i32 to vector<8x128xi32>
      %54 = arith.cmpi eq, %50, %53 : vector<8x128xi32>
      %c0_i32_33 = arith.constant 0 : i32
      %55 = vector.shape_cast %39 : vector<8x1xi32> to vector<8x1xi32>
      %56 = vector.broadcast %55 : vector<8x1xi32> to vector<8x128xi32>
      %57 = vector.broadcast %c0_i32_33 : i32 to vector<8x128xi32>
      %58 = arith.select %54, %56, %57 : vector<8x128xi1>, vector<8x128xi32>
      %59 = vector.shape_cast %49 : vector<8x1xi32> to vector<8x1xi32>
      %60 = vector.broadcast %59 : vector<8x1xi32> to vector<8x128xi32>
      %61 = arith.select %52, %60, %58 : vector<8x128xi1>, vector<8x128xi32>
      %c0_34 = arith.constant 0 : index
      %c0_35 = arith.constant 0 : index
      %62 = vector.load %arg9[%c0_34, %c0_35] : memref<8x128xi32, #tpu.memory_space<vmem>>, vector<8x128xi32>
      tpu.vector_store %arg9[%c0_34, %c0_35], %61 {strides = array<i32>} : memref<8x128xi32, #tpu.memory_space<vmem>>, vector<8x128xi32>,
    } else {
    }
    return
  }
  func.func @transform_0(%arg0: i32, %arg1: i32) -> (i32, i32) {
    %c0_i32 = arith.constant 0 : i32
    return %arg0, %arg1 : i32, i32
  }
  func.func @transform_1(%arg0: i32, %arg1: i32) -> (i32, i32) {
    %c0_i32 = arith.constant 0 : i32
    %c0_i32_0 = arith.constant 0 : i32
    return %arg1, %c0_i32 : i32, i32
  }
  func.func @transform_2(%arg0: i32, %arg1: i32) -> (i32, i32) {
    %c0_i32 = arith.constant 0 : i32
    %c0_i32_0 = arith.constant 0 : i32
    %c0_i32_1 = arith.constant 0 : i32
    return %c0_i32, %c0_i32_0 : i32, i32
  }
  func.func @transform_3(%arg0: i32, %arg1: i32) -> (i32, i32) {
    %c0_i32 = arith.constant 0 : i32
    %c0_i32_0 = arith.constant 0 : i32
    %c0_i32_1 = arith.constant 0 : i32
    return %c0_i32, %c0_i32_0 : i32, i32
  }
  func.func @transform_4(%arg0: i32, %arg1: i32) -> (i32, i32) {
    %c0_i32 = arith.constant 0 : i32
    %c0_i32_0 = arith.constant 0 : i32
    %c0_i32_1 = arith.constant 0 : i32
    return %c0_i32, %c0_i32_0 : i32, i32
  }
  func.func @transform_5(%arg0: i32, %arg1: i32) -> (i32, i32) {
    %c0_i32 = arith.constant 0 : i32
    %c0_i32_0 = arith.constant 0 : i32
    return %arg0, %c0_i32 : i32, i32
  }
  func.func @transform_6(%arg0: i32, %arg1: i32) -> (i32, i32) {
    %c0_i32 = arith.constant 0 : i32
    %c0_i32_0 = arith.constant 0 : i32
    return %arg0, %c0_i32 : i32, i32
  }
  func.func @transform_7(%arg0: i32, %arg1: i32) -> (i32, i32) {
    %c0_i32 = arith.constant 0 : i32
    %c0_i32_0 = arith.constant 0 : i32
    return %arg0, %c0_i32 : i32, i32
  }
}

</mosaic_0001>

<llo_original>
// kernel: tpu_custom_call.1
$region0: #{tpu_custom_call.1}
  #allocation0 [shape = 'u32[]', space=smem, size = 0x4, offset = 0x4, fixed_abs, tag = 'smem constant byte address 0x4 - core index']
  #allocation1 [shape = 'u32[144,128]{1,0:T(1,128)}', space=vmem, size = 0x12000, scoped, tag = 'internal scratch']
  #allocation2 [shape = 'f32[8,128]{1,0:T(8,128)}', space=vmem, size = 0x1000, scoped, tag = 'scratch operand']
  %s0 = inlined_call_operand.hbm [shape: f32[8,1024], index: 0, kind: input, shape index: {}]
  %s1 = inlined_call_operand.hbm [shape: bf16[1024,128], index: 1, kind: input, shape index: {}]
  %s2 = inlined_call_operand.vmem [shape: f32[1,128], index: 2, kind: input, shape index: {}]
  %s3 = inlined_call_operand.hbm [shape: f32[128,128], index: 3, kind: input, shape index: {}]
  %s4 = inlined_call_operand.hbm [shape: f32[1,128], index: 4, kind: input, shape index: {}]
  %s5 = inlined_call_operand.vmem [shape: f32[8,128], index: 5, kind: input, shape index: {}]
  %s6 = inlined_call_operand.hbm [shape: f32[8,128], index: 6, kind: input, shape index: {}]
  %s7 = inlined_call_operand.hbm [shape: s32[8,128], index: 7, kind: output, shape index: {}]
  %s8 = sld [smem:[#allocation0]]
  $region89: #{tpu_custom_call.1} parent=0
    _
  %s10 = ssub.s32 1, %s8
  %s11 = scalar_select 0, %s10, %s8
  $region1: #{tpu_custom_call.1} parent=0
    #allocation3 [shape = 'u8[32768]{0}', space=vmem, size = 0x8000, scoped, tag = 'input window, operand 0']
    #allocation4 [shape = 's32[2]{0}', space=sflag, size = 0x8, scoped, tag = 'scoped memory for tpu_custom_call.1']
    #allocation5 [shape = 's32[2]{0}', space=sflag, size = 0x8, scoped, tag = 'scoped memory for tpu_custom_call.1']
    #allocation6 [shape = 'u8[262144]{0}', space=vmem, size = 0x40000, scoped, tag = 'input window, operand 1']
    #allocation7 [shape = 's32[2]{0}', space=sflag, size = 0x8, scoped, tag = 'scoped memory for tpu_custom_call.1']
    #allocation8 [shape = 'u8[65536]{0}', space=vmem, size = 0x10000, scoped, tag = 'input window, operand 3, single buffered']
    #allocation9 [shape = 'u8[512]{0}', space=vmem, size = 0x400, scoped, tag = 'input window, operand 4, single buffered']
    #allocation10 [shape = 's32[1]{0}', space=sflag, size = 0x4, scoped, tag = 'scoped memory for tpu_custom_call.1']
    #allocation11 [shape = 'u8[4096]{0}', space=vmem, size = 0x1000, scoped, tag = 'input window, operand 6, single buffered']
    #allocation12 [shape = 'u8[4096]{0}', space=vmem, size = 0x1000, scoped, tag = 'output window, operand 0, single buffered']
    %12 = vsyncpa [#allocation4], 0
    %s13 = scalar_lea.sflag [#allocation4], 1
    %14 = vsyncpa %s13, 0
    %15 = vsyncpa [#allocation7], 0
    %s16 = scalar_lea.sflag [#allocation7], 1
    %17 = vsyncpa %s16, 0
    %18 = vsyncpa [#allocation10], 0
    %19 = vsyncpa [#allocation5], 0
    loop: start=0, step=1, limit=4
    $region2: #{tpu_custom_call.1} parent=1 // loop_pre_header
      _
    $region3: #{tpu_custom_call.1} parent=1 // loop_header
      %s21 = sphi 0, %s25
      %p22 = scmp.ge.s32.totalorder %s21, 4
      %s28 = sphi 0, %s40
      %s29 = sphi 0, %s36
      %s30 = sphi 0, %s28
      %s31 = sphi 0, %s29
      %s32 = sphi 0, %s30
      %s33 = sphi 0, %s31
      %s45 = sphi 0, %s47
      %s48 = sphi 0, %s45
      %s49 = sphi 0, %s48
      %s65 = sphi 0, %s49
      %s71 = sphi 0, %s73
      %s74 = sphi 0, %s71
      %s75 = sphi 0, %s74
      %s91 = sphi 0, %s75
      %s95 = sphi 0, %s95
      %s97 = sphi 0, %s95
      %s98 = sphi 0, %s97
      %s112 = sphi 0, %s98
      %s116 = sphi 0, %s116
      %s118 = sphi 0, %s116
      %s119 = sphi 0, %s118
      %s133 = sphi 0, %s119
      %s137 = sphi 0, %s137
      %s139 = sphi 0, %s137
      %s140 = sphi 0, %s139
      %s154 = sphi 0, %s140
      %s160 = sphi 0, %s162
      %s163 = sphi 0, %s160
      %s164 = sphi 0, %s163
      %s180 = sphi 0, %s164
      %s186 = sphi 0, %s188
      %s189 = sphi 0, %s186
      %s190 = sphi 0, %s189
      %s206 = sphi 0, %s190
      %s212 = sphi 0, %s214
      %s215 = sphi 0, %s212
      %s216 = sphi 0, %s215
      %s232 = sphi 0, %s216
    $region4: #{tpu_custom_call.1} parent=1 // loop_header_branch
      %24 = sbr.rel (%p22) target = $region8
    $region5: #{tpu_custom_call.1} parent=1 // loop_body
      %s26 = ssub.s32 %s21, 1
      %s27 = ssub.s32 %s21, 2
      %s34 = sadd.s32 1, %s29
      %p35 = scmp.ge.s32.totalorder %s34, 2
      %s36 = scalar_select %p35, 0, %s34
      %s37 = sadd.s32 1, %s28
      %s38 = scalar_select %p35, %s37, %s28
      %p39 = scmp.ge.s32.totalorder %s38, 1
      %s40 = scalar_select %p39, 0, %s38
      %s41 = ssub.s32 %s28, %s40
      %s42 = ssub.s32 %s29, %s36
      %s43 = sor.u32 %s41, %s42
      %p44 = scmp.eq.s32.totalorder %s43, 0
      %s46 = sadd.s32 %s45, 1
      %s47 = scalar_select %p44, %s45, %s46
      %p50 = pneg %p44
      %p51 = scmp.eq.s32.totalorder %s21, 1
      %p52 = por %p50, %p51
      %p53 = scmp.ne.s32.totalorder %s45, %s48
      %p54 = scmp.eq.s32.totalorder %s21, 0
      %p55 = por %p53, %p54
      %p56 = scmp.ne.s32.totalorder %s45, %s48
      %p57 = scmp.eq.s32.totalorder %s26, 1
      %p58 = por %p56, %p57
      %p59 = scmp.ne.s32.totalorder %s48, %s49
      %p60 = scmp.eq.s32.totalorder %s26, 0
      %p61 = por %p59, %p60
      %p62 = scmp.ne.s32.totalorder %s48, %s49
      %p63 = scmp.eq.s32.totalorder %s27, 1
      %p64 = por %p62, %p63
      %p66 = scmp.ne.s32.totalorder %s49, %s65
      %p67 = scmp.eq.s32.totalorder %s27, 0
      %p68 = por %p66, %p67
      %s69 = ssub.s32 %s29, %s36
      %p70 = scmp.eq.s32.totalorder %s69, 0
      %s72 = sadd.s32 %s71, 1
      %s73 = scalar_select %p70, %s71, %s72
      %p76 = pneg %p70
      %p77 = scmp.eq.s32.totalorder %s21, 1
      %p78 = por %p76, %p77
      %p79 = scmp.ne.s32.totalorder %s71, %s74
      %p80 = scmp.eq.s32.totalorder %s21, 0
      %p81 = por %p79, %p80
      %p82 = scmp.ne.s32.totalorder %s71, %s74
      %p83 = scmp.eq.s32.totalorder %s26, 1
      %p84 = por %p82, %p83
      %p85 = scmp.ne.s32.totalorder %s74, %s75
      %p86 = scmp.eq.s32.totalorder %s26, 0
      %p87 = por %p85, %p86
      %p88 = scmp.ne.s32.totalorder %s74, %s75
      %p89 = scmp.eq.s32.totalorder %s27, 1
      %p90 = por %p88, %p89
      %p92 = scmp.ne.s32.totalorder %s75, %s91
      %p93 = scmp.eq.s32.totalorder %s27, 0
      %p94 = por %p92, %p93
      %s96 = sadd.s32 %s95, 1
      %p99 = scmp.eq.s32.totalorder %s21, 1
      %p100 = scmp.ne.s32.totalorder %s95, %s97
      %p101 = scmp.eq.s32.totalorder %s21, 0
      %p102 = por %p100, %p101
      %p103 = scmp.ne.s32.totalorder %s95, %s97
      %p104 = scmp.eq.s32.totalorder %s26, 1
      %p105 = por %p103, %p104
      %p106 = scmp.ne.s32.totalorder %s97, %s98
      %p107 = scmp.eq.s32.totalorder %s26, 0
      %p108 = por %p106, %p107
      %p109 = scmp.ne.s32.totalorder %s97, %s98
      %p110 = scmp.eq.s32.totalorder %s27, 1
      %p111 = por %p109, %p110
      %p113 = scmp.ne.s32.totalorder %s98, %s112
      %p114 = scmp.eq.s32.totalorder %s27, 0
      %p115 = por %p113, %p114
      %s117 = sadd.s32 %s116, 1
      %p120 = scmp.eq.s32.totalorder %s21, 1
      %p121 = scmp.ne.s32.totalorder %s116, %s118
      %p122 = scmp.eq.s32.totalorder %s21, 0
      %p123 = por %p121, %p122
      %p124 = scmp.ne.s32.totalorder %s116, %s118
      %p125 = scmp.eq.s32.totalorder %s26, 1
      %p126 = por %p124, %p125
      %p127 = scmp.ne.s32.totalorder %s118, %s119
      %p128 = scmp.eq.s32.totalorder %s26, 0
      %p129 = por %p127, %p128
      %p130 = scmp.ne.s32.totalorder %s118, %s119
      %p131 = scmp.eq.s32.totalorder %s27, 1
      %p132 = por %p130, %p131
      %p134 = scmp.ne.s32.totalorder %s119, %s133
      %p135 = scmp.eq.s32.totalorder %s27, 0
      %p136 = por %p134, %p135
      %s138 = sadd.s32 %s137, 1
      %p141 = scmp.eq.s32.totalorder %s21, 1
      %p142 = scmp.ne.s32.totalorder %s137, %s139
      %p143 = scmp.eq.s32.totalorder %s21, 0
      %p144 = por %p142, %p143
      %p145 = scmp.ne.s32.totalorder %s137, %s139
      %p146 = scmp.eq.s32.totalorder %s26, 1
      %p147 = por %p145, %p146
      %p148 = scmp.ne.s32.totalorder %s139, %s140
      %p149 = scmp.eq.s32.totalorder %s26, 0
      %p150 = por %p148, %p149
      %p151 = scmp.ne.s32.totalorder %s139, %s140
      %p152 = scmp.eq.s32.totalorder %s27, 1
      %p153 = por %p151, %p152
      %p155 = scmp.ne.s32.totalorder %s140, %s154
      %p156 = scmp.eq.s32.totalorder %s27, 0
      %p157 = por %p155, %p156
      %s158 = ssub.s32 %s28, %s40
      %p159 = scmp.eq.s32.totalorder %s158, 0
      %s161 = sadd.s32 %s160, 1
      %s162 = scalar_select %p159, %s160, %s161
      %p165 = pneg %p159
      %p166 = scmp.eq.s32.totalorder %s21, 1
      %p167 = por %p165, %p166
      %p168 = scmp.ne.s32.totalorder %s160, %s163
      %p169 = scmp.eq.s32.totalorder %s21, 0
      %p170 = por %p168, %p169
      %p171 = scmp.ne.s32.totalorder %s160, %s163
      %p172 = scmp.eq.s32.totalorder %s26, 1
      %p173 = por %p171, %p172
      %p174 = scmp.ne.s32.totalorder %s163, %s164
      %p175 = scmp.eq.s32.totalorder %s26, 0
      %p176 = por %p174, %p175
      %p177 = scmp.ne.s32.totalorder %s163, %s164
      %p178 = scmp.eq.s32.totalorder %s27, 1
      %p179 = por %p177, %p178
      %p181 = scmp.ne.s32.totalorder %s164, %s180
      %p182 = scmp.eq.s32.totalorder %s27, 0
      %p183 = por %p181, %p182
      %s184 = ssub.s32 %s28, %s40
      %p185 = scmp.eq.s32.totalorder %s184, 0
      %s187 = sadd.s32 %s186, 1
      %s188 = scalar_select %p185, %s186, %s187
      %p191 = pneg %p185
      %p192 = scmp.eq.s32.totalorder %s21, 1
      %p193 = por %p191, %p192
      %p194 = scmp.ne.s32.totalorder %s186, %s189
      %p195 = scmp.eq.s32.totalorder %s21, 0
      %p196 = por %p194, %p195
      %p197 = scmp.ne.s32.totalorder %s186, %s189
      %p198 = scmp.eq.s32.totalorder %s26, 1
      %p199 = por %p197, %p198
      %p200 = scmp.ne.s32.totalorder %s189, %s190
      %p201 = scmp.eq.s32.totalorder %s26, 0
      %p202 = por %p200, %p201
      %p203 = scmp.ne.s32.totalorder %s189, %s190
      %p204 = scmp.eq.s32.totalorder %s27, 1
      %p205 = por %p203, %p204
      %p207 = scmp.ne.s32.totalorder %s190, %s206
      %p208 = scmp.eq.s32.totalorder %s27, 0
      %p209 = por %p207, %p208
      %s210 = ssub.s32 %s28, %s40
      %p211 = scmp.eq.s32.totalorder %s210, 0
      %s213 = sadd.s32 %s212, 1
      %s214 = scalar_select %p211, %s212, %s213
      %p217 = pneg %p211
      %p218 = scmp.eq.s32.totalorder %s21, 1
      %p219 = por %p217, %p218
      %p220 = scmp.ne.s32.totalorder %s212, %s215
      %p221 = scmp.eq.s32.totalorder %s21, 0
      %p222 = por %p220, %p221
      %p223 = scmp.ne.s32.totalorder %s212, %s215
      %p224 = scmp.eq.s32.totalorder %s26, 1
      %p225 = por %p223, %p224
      %p226 = scmp.ne.s32.totalorder %s215, %s216
      %p227 = scmp.eq.s32.totalorder %s26, 0
      %p228 = por %p226, %p227
      %p229 = scmp.ne.s32.totalorder %s215, %s216
      %p230 = scmp.eq.s32.totalorder %s27, 1
      %p231 = por %p229, %p230
      %p233 = scmp.ne.s32.totalorder %s216, %s232
      %p234 = scmp.eq.s32.totalorder %s27, 0
      %p235 = por %p233, %p234
      %p236 = scmp.le.s32.totalorder 1, %s21
      %p237 = scmp.lt.s32.totalorder %s21, 3
      %p238 = pnand %p236, %p237
      %p239 = pneg %p238
      // Predicated region
      $region9: #{tpu_custom_call.1} parent=5 // pred_check
        _
      $region10: #{tpu_custom_call.1} parent=5 // pred_check_branch
        %241 = sbr.rel (%p238) target = $region12
      $region11: #{tpu_custom_call.1} parent=5 // pred_region
        %s242 = ssub.s32 %s21, 1
        // Predicated region
        $region13: #{tpu_custom_call.1} parent=11 // pred_check
          %p243 = pneg %p108
        $region14: #{tpu_custom_call.1} parent=11 // pred_check_branch
          %245 = sbr.rel (%p243) target = $region16
        $region15: #{tpu_custom_call.1} parent=11 // pred_region
          _
        $region16: #{tpu_custom_call.1} parent=11 // pred_fallthru
          _
        // Predicated region
        $region17: #{tpu_custom_call.1} parent=11 // pred_check
          %p246 = pneg %p129
        $region18: #{tpu_custom_call.1} parent=11 // pred_check_branch
          %248 = sbr.rel (%p246) target = $region20
        $region19: #{tpu_custom_call.1} parent=11 // pred_region
          %s250 = ssub.s32 2048, 2048
          %251 = vsyncadd [#allocation7], %s250
          %s252 = sshll.u32 [#allocation8], 4
          %s253 = int_to_ptr.vmem [resolvable:$true] %s252
          %258 = dma.hbm_to_vmem [thread:$0]  %s3, 2048, %s253, [#allocation7], 128, 128, 8
        $region20: #{tpu_custom_call.1} parent=11 // pred_fallthru
          _
        // Predicated region
        $region21: #{tpu_custom_call.1} parent=11 // pred_check
          %p259 = pneg %p150
        $region22: #{tpu_custom_call.1} parent=11 // pred_check_branch
          %261 = sbr.rel (%p259) target = $region24
        $region23: #{tpu_custom_call.1} parent=11 // pred_region
          %s263 = ssub.s32 16, 16
          %264 = vsyncadd [#allocation10], %s263
          %s266 = sshll.u32 [#allocation9], 4
          %s267 = int_to_ptr.vmem [resolvable:$true] %s266
          %269 = dma.hbm_to_vmem [thread:$0]  %s4, 16, %s267, [#allocation10]
        $region24: #{tpu_custom_call.1} parent=11 // pred_fallthru
          _
        // Predicated region
        $region25: #{tpu_custom_call.1} parent=11 // pred_check
          %p270 = pneg %p176
        $region26: #{tpu_custom_call.1} parent=11 // pred_check_branch
          %272 = sbr.rel (%p270) target = $region28
        $region27: #{tpu_custom_call.1} parent=11 // pred_region
          %p273 = scmp.lt.s32.totalorder %s30, 0
          %s274 = scalar_select %p273, %s30, 0
          %s275 = smul.addr %s274, 8
          %s276 = scalar_lea.vmem %s5, %s275
        $region28: #{tpu_custom_call.1} parent=11 // pred_fallthru
          _
        // Predicated region
        $region29: #{tpu_custom_call.1} parent=11 // pred_check
          %p277 = pneg %p202
        $region30: #{tpu_custom_call.1} parent=11 // pred_check_branch
          %279 = sbr.rel (%p277) target = $region32
        $region31: #{tpu_custom_call.1} parent=11 // pred_region
          %s281 = ssub.s32 128, 128
          %282 = vsyncadd [#allocation10], %s281
          %s283 = smul.addr %s30, 128
          %s284 = scalar_lea.hbm %s6, %s283
          %s286 = sshll.u32 [#allocation11], 4
          %s287 = int_to_ptr.vmem [resolvable:$true] %s286
          %289 = dma.hbm_to_vmem [thread:$0]  %s284, 128, %s287, [#allocation10]
        $region32: #{tpu_custom_call.1} parent=11 // pred_fallthru
          _
      $region12: #{tpu_custom_call.1} parent=5 // pred_fallthru
        _
      %p290 = scmp.lt.s32.totalorder %s21, 2
      // Predicated region
      $region33: #{tpu_custom_call.1} parent=5 // pred_check
        %p291 = pneg %p290
      $region34: #{tpu_custom_call.1} parent=5 // pred_check_branch
        %293 = sbr.rel (%p291) target = $region36
      $region35: #{tpu_custom_call.1} parent=5 // pred_region
        // Predicated region
        $region37: #{tpu_custom_call.1} parent=35 // pred_check
          %p294 = pneg %p55
        $region38: #{tpu_custom_call.1} parent=35 // pred_check_branch
          %296 = sbr.rel (%p294) target = $region40
        $region39: #{tpu_custom_call.1} parent=35 // pred_region
          %s297 = sand.u32 %s45, 1
          %s298 = scalar_lea.sflag [#allocation4], %s297
          %s299 = sand.u32 %s45, 1
          %s300 = smul.addr %s299, 32
          %s301 = scalar_lea.vmem [#allocation3], %s300
          %s302 = smul.u32 4, %s29
          %s304 = ssub.s32 512, 512
          %305 = vsyncadd %s298, %s304
          %s306 = smul.addr %s28, 8
          %s307 = sadd.s32 %s302, %s306
          %s308 = smul.addr %s307, 128
          %s309 = scalar_lea.hbm %s0, %s308
          %s311 = sshll.u32 %s301, 4
          %s312 = int_to_ptr.vmem [resolvable:$true] %s311
          %314 = dma.hbm_to_vmem [thread:$0]  %s309, 512, %s312, %s298
        $region40: #{tpu_custom_call.1} parent=35 // pred_fallthru
          _
        // Predicated region
        $region41: #{tpu_custom_call.1} parent=35 // pred_check
          %p315 = pneg %p81
        $region42: #{tpu_custom_call.1} parent=35 // pred_check_branch
          %317 = sbr.rel (%p315) target = $region44
        $region43: #{tpu_custom_call.1} parent=35 // pred_region
          %s318 = sand.u32 %s21, 1
          %s319 = scalar_lea.sflag [#allocation7], %s318
          %s320 = sand.u32 %s71, 1
          %s321 = smul.addr %s320, 256
          %s322 = scalar_lea.vmem [#allocation6], %s321
          %s323 = smul.u32 64, %s29
          %s325 = ssub.s32 4096, 4096
          %326 = vsyncadd %s319, %s325
          %s327 = smul.addr %s323, 64
          %s328 = scalar_lea.hbm %s1, %s327
          %s329 = sshll.u32 %s322, 4
          %s330 = int_to_ptr.vmem [resolvable:$true] %s329
          %335 = dma.hbm_to_vmem [thread:$0]  %s328, 4096, %s330, %s319, 64, 64, 4
        $region44: #{tpu_custom_call.1} parent=35 // pred_fallthru
          _
      $region36: #{tpu_custom_call.1} parent=5 // pred_fallthru
        _
      %p336 = scmp.le.s32.totalorder 1, %s21
      %p337 = scmp.lt.s32.totalorder %s21, 3
      %p338 = pnand %p336, %p337
      %p339 = pneg %p338
      // Predicated region
      $region45: #{tpu_custom_call.1} parent=5 // pred_check
        _
      $region46: #{tpu_custom_call.1} parent=5 // pred_check_branch
        %341 = sbr.rel (%p338) target = $region48
      $region47: #{tpu_custom_call.1} parent=5 // pred_region
        %s342 = ssub.s32 %s21, 1
        %s343 = sand.u32 %s48, 1
        %s344 = scalar_lea.sflag [#allocation4], %s343
        %s345 = sand.u32 %s48, 1
        %s346 = smul.addr %s345, 32
        %s347 = scalar_lea.vmem [#allocation3], %s346
        // Predicated region
        $region49: #{tpu_custom_call.1} parent=47 // pred_check
          %p348 = pneg %p61
        $region50: #{tpu_custom_call.1} parent=47 // pred_check_branch
          %350 = sbr.rel (%p348) target = $region52
        $region51: #{tpu_custom_call.1} parent=47 // pred_region
          %351 = dma.done %s344, 512
        $region52: #{tpu_custom_call.1} parent=47 // pred_fallthru
          _
        %s352 = sand.u32 %s26, 1
        %s353 = scalar_lea.sflag [#allocation7], %s352
        %s354 = sand.u32 %s74, 1
        %s355 = smul.addr %s354, 256
        %s356 = scalar_lea.vmem [#allocation6], %s355
        // Predicated region
        $region53: #{tpu_custom_call.1} parent=47 // pred_check
          %p357 = pneg %p87
        $region54: #{tpu_custom_call.1} parent=47 // pred_check_branch
          %359 = sbr.rel (%p357) target = $region56
        $region55: #{tpu_custom_call.1} parent=47 // pred_region
          %360 = dma.done %s353, 4096
        $region56: #{tpu_custom_call.1} parent=47 // pred_fallthru
          _
        // Predicated region
        $region57: #{tpu_custom_call.1} parent=47 // pred_check
          %p361 = pneg %p129
        $region58: #{tpu_custom_call.1} parent=47 // pred_check_branch
          %363 = sbr.rel (%p361) target = $region60
        $region59: #{tpu_custom_call.1} parent=47 // pred_region
          %364 = dma.done [#allocation7], 2048
        $region60: #{tpu_custom_call.1} parent=47 // pred_fallthru
          _
        // Predicated region
        $region61: #{tpu_custom_call.1} parent=47 // pred_check
          %p365 = pneg %p150
        $region62: #{tpu_custom_call.1} parent=47 // pred_check_branch
          %367 = sbr.rel (%p365) target = $region64
        $region63: #{tpu_custom_call.1} parent=47 // pred_region
          %368 = dma.done [#allocation10], 16
        $region64: #{tpu_custom_call.1} parent=47 // pred_fallthru
          _
        // Predicated region
        $region65: #{tpu_custom_call.1} parent=47 // pred_check
          %p369 = pneg %p202
        $region66: #{tpu_custom_call.1} parent=47 // pred_check_branch
          %371 = sbr.rel (%p369) target = $region68
        $region67: #{tpu_custom_call.1} parent=47 // pred_region
          %372 = dma.done [#allocation10], 128
        $region68: #{tpu_custom_call.1} parent=47 // pred_fallthru
          _
        %s373 = sand.u32 %s48, 1
        %s374 = scalar_lea.sflag [#allocation4], %s373
        %s375 = sand.u32 %s48, 1
        %s376 = smul.addr %s375, 32
        %s377 = scalar_lea.vmem [#allocation3], %s376
        %p378 = pneg %p61
        %p379 = pneg %p58
        %s380 = sand.u32 %s26, 1
        %s381 = scalar_lea.sflag [#allocation7], %s380
        %s382 = sand.u32 %s74, 1
        %s383 = smul.addr %s382, 256
        %s384 = scalar_lea.vmem [#allocation6], %s383
        %p385 = pneg %p87
        %p386 = pneg %p84
        %p387 = pneg %p108
        %p388 = pneg %p105
        %p389 = pneg %p129
        %p390 = pneg %p126
        %p391 = pneg %p150
        %p392 = pneg %p147
        %p393 = scmp.lt.s32.totalorder %s30, 0
        %s394 = scalar_select %p393, %s30, 0
        %s395 = smul.addr %s394, 8
        %s396 = scalar_lea.vmem %s5, %s395
        %p397 = pneg %p176
        %p398 = pneg %p173
        %p399 = pneg %p202
        %p400 = pneg %p199
        %p401 = pneg %p228
        %p402 = pneg %p225
        %s403 = smul.u32 4, %s31
        %s404 = smul.u32 64, %s31
        %p405 = scmp.lt.s32.totalorder %s30, 0
        %s406 = scalar_select %p405, %s30, 0
        %s407 = smul.addr %s406, 8
        %s408 = scalar_lea.vmem %s5, %s407
        %p410 = scmp.eq.s32.totalorder %s31, 0
        // Predicated region
        $region69: #{tpu_custom_call.1} parent=47 // pred_check
          %p411 = pneg %p410
        $region70: #{tpu_custom_call.1} parent=47 // pred_check_branch
          %413 = sbr.rel (%p411) target = $region72
        $region71: #{tpu_custom_call.1} parent=47 // pred_region
          %414 = vst [vmem:[#allocation2] sm:$0xff] 0.0
        $region72: #{tpu_custom_call.1} parent=47 // pred_fallthru
          _
        %v415 = vld [vmem:[#allocation2] sm:$0xff]
        %v416 = vld [vmem:[%s347] sm:$0xff]
        %v417 = vld [vmem:[%s347 + $0x8] sm:$0xff]
        %v418 = vld [vmem:[%s347 + $0x10] sm:$0xff]
        %v419 = vld [vmem:[%s347 + $0x18] sm:$0xff]
        %v420 = vpack.c.bf16 %v416, %v416
        %v421 = vpack.c.bf16 %v417, %v417
        %v422 = vpack.c.bf16 %v418, %v418
        %v423 = vpack.c.bf16 %v419, %v419
        %v424 = vld [vmem:[%s356] sm:$0xf]
        %v425 = vld [vmem:[%s356 + $0x4] sm:$0xf]
        %v426 = vld [vmem:[%s356 + $0x8] sm:$0xf]
        %v427 = vld [vmem:[%s356 + $0xc] sm:$0xf]
        %v428 = vld [vmem:[%s356 + $0x10] sm:$0xf]
        %v429 = vld [vmem:[%s356 + $0x14] sm:$0xf]
        %v430 = vld [vmem:[%s356 + $0x18] sm:$0xf]
        %v431 = vld [vmem:[%s356 + $0x1c] sm:$0xf]
        %v432 = vld [vmem:[%s356 + $0x20] sm:$0xf]
        %v433 = vld [vmem:[%s356 + $0x24] sm:$0xf]
        %v434 = vld [vmem:[%s356 + $0x28] sm:$0xf]
        %v435 = vld [vmem:[%s356 + $0x2c] sm:$0xf]
        %v436 = vld [vmem:[%s356 + $0x30] sm:$0xf]
        %v437 = vld [vmem:[%s356 + $0x34] sm:$0xf]
        %v438 = vld [vmem:[%s356 + $0x38] sm:$0xf]
        %v439 = vld [vmem:[%s356 + $0x3c] sm:$0xf]
        %v440 = vld [vmem:[%s356 + $0x40] sm:$0xf]
        %v441 = vld [vmem:[%s356 + $0x44] sm:$0xf]
        %v442 = vld [vmem:[%s356 + $0x48] sm:$0xf]
        %v443 = vld [vmem:[%s356 + $0x4c] sm:$0xf]
        %v444 = vld [vmem:[%s356 + $0x50] sm:$0xf]
        %v445 = vld [vmem:[%s356 + $0x54] sm:$0xf]
        %v446 = vld [vmem:[%s356 + $0x58] sm:$0xf]
        %v447 = vld [vmem:[%s356 + $0x5c] sm:$0xf]
        %v448 = vld [vmem:[%s356 + $0x60] sm:$0xf]
        %v449 = vld [vmem:[%s356 + $0x64] sm:$0xf]
        %v450 = vld [vmem:[%s356 + $0x68] sm:$0xf]
        %v451 = vld [vmem:[%s356 + $0x6c] sm:$0xf]
        %v452 = vld [vmem:[%s356 + $0x70] sm:$0xf]
        %v453 = vld [vmem:[%s356 + $0x74] sm:$0xf]
        %v454 = vld [vmem:[%s356 + $0x78] sm:$0xf]
        %v455 = vld [vmem:[%s356 + $0x7c] sm:$0xf]
        %v456 = vld [vmem:[%s356 + $0x80] sm:$0xf]
        %v457 = vld [vmem:[%s356 + $0x84] sm:$0xf]
        %v458 = vld [vmem:[%s356 + $0x88] sm:$0xf]
        %v459 = vld [vmem:[%s356 + $0x8c] sm:$0xf]
        %v460 = vld [vmem:[%s356 + $0x90] sm:$0xf]
        %v461 = vld [vmem:[%s356 + $0x94] sm:$0xf]
        %v462 = vld [vmem:[%s356 + $0x98] sm:$0xf]
        %v463 = vld [vmem:[%s356 + $0x9c] sm:$0xf]
        %v464 = vld [vmem:[%s356 + $0xa0] sm:$0xf]
        %v465 = vld [vmem:[%s356 + $0xa4] sm:$0xf]
        %v466 = vld [vmem:[%s356 + $0xa8] sm:$0xf]
        %v467 = vld [vmem:[%s356 + $0xac] sm:$0xf]
        %v468 = vld [vmem:[%s356 + $0xb0] sm:$0xf]
        %v469 = vld [vmem:[%s356 + $0xb4] sm:$0xf]
        %v470 = vld [vmem:[%s356 + $0xb8] sm:$0xf]
        %v471 = vld [vmem:[%s356 + $0xbc] sm:$0xf]
        %v472 = vld [vmem:[%s356 + $0xc0] sm:$0xf]
        %v473 = vld [vmem:[%s356 + $0xc4] sm:$0xf]
        %v474 = vld [vmem:[%s356 + $0xc8] sm:$0xf]
        %v475 = vld [vmem:[%s356 + $0xcc] sm:$0xf]
        %v476 = vld [vmem:[%s356 + $0xd0] sm:$0xf]
        %v477 = vld [vmem:[%s356 + $0xd4] sm:$0xf]
        %v478 = vld [vmem:[%s356 + $0xd8] sm:$0xf]
        %v479 = vld [vmem:[%s356 + $0xdc] sm:$0xf]
        %v480 = vld [vmem:[%s356 + $0xe0] sm:$0xf]
        %v481 = vld [vmem:[%s356 + $0xe4] sm:$0xf]
        %v482 = vld [vmem:[%s356 + $0xe8] sm:$0xf]
        %v483 = vld [vmem:[%s356 + $0xec] sm:$0xf]
        %v484 = vld [vmem:[%s356 + $0xf0] sm:$0xf]
        %v485 = vld [vmem:[%s356 + $0xf4] sm:$0xf]
        %v486 = vld [vmem:[%s356 + $0xf8] sm:$0xf]
        %v487 = vld [vmem:[%s356 + $0xfc] sm:$0xf]
        %v552 = vunpack.c.l.b16 %v424
        %v553 = vunpack.c.l.b16 %v425
        %v554 = vunpack.c.l.b16 %v426
        %v555 = vunpack.c.l.b16 %v427
        %v556 = vunpack.c.l.b16 %v428
        %v557 = vunpack.c.l.b16 %v429
        %v558 = vunpack.c.l.b16 %v430
        %v559 = vunpack.c.l.b16 %v431
        %v560 = vunpack.c.l.b16 %v432
        %v561 = vunpack.c.l.b16 %v433
        %v562 = vunpack.c.l.b16 %v434
        %v563 = vunpack.c.l.b16 %v435
        %v564 = vunpack.c.l.b16 %v436
        %v565 = vunpack.c.l.b16 %v437
        %v566 = vunpack.c.l.b16 %v438
        %v567 = vunpack.c.l.b16 %v439
        %v568 = vunpack.c.l.b16 %v440
        %v569 = vunpack.c.l.b16 %v441
        %v570 = vunpack.c.l.b16 %v442
        %v571 = vunpack.c.l.b16 %v443
        %v572 = vunpack.c.l.b16 %v444
        %v573 = vunpack.c.l.b16 %v445
        %v574 = vunpack.c.l.b16 %v446
        %v575 = vunpack.c.l.b16 %v447
        %v576 = vunpack.c.l.b16 %v448
        %v577 = vunpack.c.l.b16 %v449
        %v578 = vunpack.c.l.b16 %v450
        %v579 = vunpack.c.l.b16 %v451
        %v580 = vunpack.c.l.b16 %v452
        %v581 = vunpack.c.l.b16 %v453
        %v582 = vunpack.c.l.b16 %v454
        %v583 = vunpack.c.l.b16 %v455
        %v584 = vunpack.c.l.b16 %v456
        %v585 = vunpack.c.l.b16 %v457
        %v586 = vunpack.c.l.b16 %v458
        %v587 = vunpack.c.l.b16 %v459
        %v588 = vunpack.c.l.b16 %v460
        %v589 = vunpack.c.l.b16 %v461
        %v590 = vunpack.c.l.b16 %v462
        %v591 = vunpack.c.l.b16 %v463
        %v592 = vunpack.c.l.b16 %v464
        %v593 = vunpack.c.l.b16 %v465
        %v594 = vunpack.c.l.b16 %v466
        %v595 = vunpack.c.l.b16 %v467
        %v596 = vunpack.c.l.b16 %v468
        %v597 = vunpack.c.l.b16 %v469
        %v598 = vunpack.c.l.b16 %v470
        %v599 = vunpack.c.l.b16 %v471
        %v600 = vunpack.c.l.b16 %v472
        %v601 = vunpack.c.l.b16 %v473
        %v602 = vunpack.c.l.b16 %v474
        %v603 = vunpack.c.l.b16 %v475
        %v604 = vunpack.c.l.b16 %v476
        %v605 = vunpack.c.l.b16 %v477
        %v606 = vunpack.c.l.b16 %v478
        %v607 = vunpack.c.l.b16 %v479
        %v608 = vunpack.c.l.b16 %v480
        %v609 = vunpack.c.l.b16 %v481
        %v610 = vunpack.c.l.b16 %v482
        %v611 = vunpack.c.l.b16 %v483
        %v612 = vunpack.c.l.b16 %v484
        %v613 = vunpack.c.l.b16 %v485
        %v614 = vunpack.c.l.b16 %v486
        %v615 = vunpack.c.l.b16 %v487
        %v616 = vpack.c.b16 %v553, %v552
        %v617 = vpack.c.b16 %v555, %v554
        %v618 = vpack.c.b16 %v557, %v556
        %v619 = vpack.c.b16 %v559, %v558
        %v620 = vpack.c.b16 %v561, %v560
        %v621 = vpack.c.b16 %v563, %v562
        %v622 = vpack.c.b16 %v565, %v564
        %v623 = vpack.c.b16 %v567, %v566
        %v624 = vpack.c.b16 %v569, %v568
        %v625 = vpack.c.b16 %v571, %v570
        %v626 = vpack.c.b16 %v573, %v572
        %v627 = vpack.c.b16 %v575, %v574
        %v628 = vpack.c.b16 %v577, %v576
        %v629 = vpack.c.b16 %v579, %v578
        %v630 = vpack.c.b16 %v581, %v580
        %v631 = vpack.c.b16 %v583, %v582
        %v632 = vpack.c.b16 %v585, %v584
        %v633 = vpack.c.b16 %v587, %v586
        %v634 = vpack.c.b16 %v589, %v588
        %v635 = vpack.c.b16 %v591, %v590
        %v636 = vpack.c.b16 %v593, %v592
        %v637 = vpack.c.b16 %v595, %v594
        %v638 = vpack.c.b16 %v597, %v596
        %v639 = vpack.c.b16 %v599, %v598
        %v640 = vpack.c.b16 %v601, %v600
        %v641 = vpack.c.b16 %v603, %v602
        %v642 = vpack.c.b16 %v605, %v604
        %v643 = vpack.c.b16 %v607, %v606
        %v644 = vpack.c.b16 %v609, %v608
        %v645 = vpack.c.b16 %v611, %v610
        %v646 = vpack.c.b16 %v613, %v612
        %v647 = vpack.c.b16 %v615, %v614
        %680 = vmatprep.subr.bf16.mxu0 0
        %681 = vmatpush1.bf16.msra.mxu0 %v623
        %682 = vmatprep.subr.bf16.mxu0 0
        %683 = vmatpush1.bf16.msra.mxu0 %v622
        %684 = vmatprep.subr.bf16.mxu0 0
        %685 = vmatpush1.bf16.msra.mxu0 %v621
        %686 = vmatprep.subr.bf16.mxu0 0
        %687 = vmatpush1.bf16.msra.mxu0 %v620
        %688 = vmatprep.subr.bf16.mxu0 0
        %689 = vmatpush1.bf16.msra.mxu0 %v619
        %690 = vmatprep.subr.bf16.mxu0 0
        %691 = vmatpush1.bf16.msra.mxu0 %v618
        %692 = vmatprep.subr.bf16.mxu0 0
        %693 = vmatpush1.bf16.msra.mxu0 %v617
        %694 = vmatprep.subr.bf16.mxu0 0
        %695 = vmatpush1.bf16.msra.mxu0 %v616
        %696 = vmatprep.subr.bf16.mxu0 0
        %697 = vmatpush2.bf16.msra.mxu0 %v631
        %698 = vmatprep.subr.bf16.mxu0 0
        %699 = vmatpush2.bf16.msra.mxu0 %v630
        %700 = vmatprep.subr.bf16.mxu0 0
        %701 = vmatpush2.bf16.msra.mxu0 %v629
        %702 = vmatprep.subr.bf16.mxu0 0
        %703 = vmatpush2.bf16.msra.mxu0 %v628
        %704 = vmatprep.subr.bf16.mxu0 0
        %705 = vmatpush2.bf16.msra.mxu0 %v627
        %706 = vmatprep.subr.bf16.mxu0 0
        %707 = vmatpush2.bf16.msra.mxu0 %v626
        %708 = vmatprep.subr.bf16.mxu0 0
        %709 = vmatpush2.bf16.msra.mxu0 %v625
        %710 = vmatprep.subr.bf16.mxu0 0
        %711 = vmatpush2.bf16.msra.mxu0 %v624
        %712 = vmatprep.mubr.bf16.mxu0 %v421
        %713 = vmatmul.mubr.bf16.gmra.mxu0 %v420
        %v714 = vpop.f32.mrf.mxu0
        %v715 = vadd.f32 0.0, %v714
        %v716 = vpop.f32.mrf.mxu0
        %v717 = vpop.f32.mrf.mxu0
        %v718 = vpop.f32.mrf.mxu0
        %719 = vdwg.mxu0
        %720 = vmatprep.subr.bf16.mxu0 0
        %721 = vmatpush1.bf16.msra.mxu0 %v639
        %722 = vmatprep.subr.bf16.mxu0 0
        %723 = vmatpush1.bf16.msra.mxu0 %v638
        %724 = vmatprep.subr.bf16.mxu0 0
        %725 = vmatpush1.bf16.msra.mxu0 %v637
        %726 = vmatprep.subr.bf16.mxu0 0
        %727 = vmatpush1.bf16.msra.mxu0 %v636
        %728 = vmatprep.subr.bf16.mxu0 0
        %729 = vmatpush1.bf16.msra.mxu0 %v635
        %730 = vmatprep.subr.bf16.mxu0 0
        %731 = vmatpush1.bf16.msra.mxu0 %v634
        %732 = vmatprep.subr.bf16.mxu0 0
        %733 = vmatpush1.bf16.msra.mxu0 %v633
        %734 = vmatprep.subr.bf16.mxu0 0
        %735 = vmatpush1.bf16.msra.mxu0 %v632
        %736 = vmatprep.subr.bf16.mxu0 0
        %737 = vmatpush2.bf16.msra.mxu0 %v647
        %738 = vmatprep.subr.bf16.mxu0 0
        %739 = vmatpush2.bf16.msra.mxu0 %v646
        %740 = vmatprep.subr.bf16.mxu0 0
        %741 = vmatpush2.bf16.msra.mxu0 %v645
        %742 = vmatprep.subr.bf16.mxu0 0
        %743 = vmatpush2.bf16.msra.mxu0 %v644
        %744 = vmatprep.subr.bf16.mxu0 0
        %745 = vmatpush2.bf16.msra.mxu0 %v643
        %746 = vmatprep.subr.bf16.mxu0 0
        %747 = vmatpush2.bf16.msra.mxu0 %v642
        %748 = vmatprep.subr.bf16.mxu0 0
        %749 = vmatpush2.bf16.msra.mxu0 %v641
        %750 = vmatprep.subr.bf16.mxu0 0
        %751 = vmatpush2.bf16.msra.mxu0 %v640
        %752 = vmatprep.mubr.bf16.mxu0 %v423
        %753 = vmatmul.mubr.bf16.gmra.mxu0 %v422
        %v754 = vpop.f32.mrf.mxu0
        %v755 = vadd.f32 %v715, %v754
        %v756 = vpop.f32.mrf.mxu0
        %v757 = vpop.f32.mrf.mxu0
        %v758 = vpop.f32.mrf.mxu0
        %759 = vdwg.mxu0
        %v760 = vadd.f32 %v415, %v755
        %761 = vst [vmem:[#allocation2] sm:$0xff] %v760
        %p762 = scmp.eq.s32.totalorder %s31, 1
        // Predicated region
        $region73: #{tpu_custom_call.1} parent=47 // pred_check
          %p763 = pneg %p762
        $region74: #{tpu_custom_call.1} parent=47 // pred_check_branch
          %765 = sbr.rel (%p763) target = $region76
        $region75: #{tpu_custom_call.1} parent=47 // pred_region
          %v766 = vld [vmem:[#allocation2] sm:$0xff]
          %v767 = vld [vmem:[%s2] sm:$0x1]
          %v769 = vlaneseq
          %v770 = vshrl.u32 %v769, 7
          %v771 = vsub.s32 0, %v770
          %v772 = vrot.slane %v767, %v771
          %v774 = vadd.f32 %v766, %v772
          %v775 = vmax.f32 %v774, 0.0
          %v776 = vld [vmem:[#allocation8] sm:$0xff]
          %v777 = vld [vmem:[#allocation8 + $0x8] sm:$0xff]
          %v778 = vld [vmem:[#allocation8 + $0x10] sm:$0xff]
          %v779 = vld [vmem:[#allocation8 + $0x18] sm:$0xff]
          %v780 = vld [vmem:[#allocation8 + $0x20] sm:$0xff]
          %v781 = vld [vmem:[#allocation8 + $0x28] sm:$0xff]
          %v782 = vld [vmem:[#allocation8 + $0x30] sm:$0xff]
          %v783 = vld [vmem:[#allocation8 + $0x38] sm:$0xff]
          %v784 = vld [vmem:[#allocation8 + $0x40] sm:$0xff]
          %v785 = vld [vmem:[#allocation8 + $0x48] sm:$0xff]
          %v786 = vld [vmem:[#allocation8 + $0x50] sm:$0xff]
          %v787 = vld [vmem:[#allocation8 + $0x58] sm:$0xff]
          %v788 = vld [vmem:[#allocation8 + $0x60] sm:$0xff]
          %v789 = vld [vmem:[#allocation8 + $0x68] sm:$0xff]
          %v790 = vld [vmem:[#allocation8 + $0x70] sm:$0xff]
          %v791 = vld [vmem:[#allocation8 + $0x78] sm:$0xff]
          %v792 = vld [vmem:[#allocation9] sm:$0x1]
          %v794 = vlaneseq
          %v795 = vshrl.u32 %v794, 7
          %v796 = vsub.s32 0, %v795
          %v797 = vrot.slane %v792, %v796
          %799 = vmatprep.subr.mxu0 0.0
          %800 = vmatpush1.msra.mxu0 %v791
          %801 = vmatprep.subr.mxu0 0.0
          %802 = vmatpush1.msra.mxu0 %v790
          %803 = vmatprep.subr.mxu0 0.0
          %804 = vmatpush1.msra.mxu0 %v789
          %805 = vmatprep.subr.mxu0 0.0
          %806 = vmatpush1.msra.mxu0 %v788
          %807 = vmatprep.subr.mxu0 0.0
          %808 = vmatpush1.msra.mxu0 %v787
          %809 = vmatprep.subr.mxu0 0.0
          %810 = vmatpush1.msra.mxu0 %v786
          %811 = vmatprep.subr.mxu0 0.0
          %812 = vmatpush1.msra.mxu0 %v785
          %813 = vmatprep.subr.mxu0 0.0
          %814 = vmatpush1.msra.mxu0 %v784
          %815 = vmatprep.subr.mxu0 0.0
          %816 = vmatpush1.msra.mxu0 %v783
          %817 = vmatprep.subr.mxu0 0.0
          %818 = vmatpush1.msra.mxu0 %v782
          %819 = vmatprep.subr.mxu0 0.0
          %820 = vmatpush1.msra.mxu0 %v781
          %821 = vmatprep.subr.mxu0 0.0
          %822 = vmatpush1.msra.mxu0 %v780
          %823 = vmatprep.subr.mxu0 0.0
          %824 = vmatpush1.msra.mxu0 %v779
          %825 = vmatprep.subr.mxu0 0.0
          %826 = vmatpush1.msra.mxu0 %v778
          %827 = vmatprep.subr.mxu0 0.0
          %828 = vmatpush1.msra.mxu0 %v777
          %829 = vmatprep.subr.mxu0 0.0
          %830 = vmatpush1.msra.mxu0 %v776
          %831 = vmatprep.subr.mxu0 0.0
          %832 = vmatpush2.msra.mxu0 0.0
          %833 = vmatprep.subr.mxu0 0.0
          %834 = vmatpush2.msra.mxu0 0.0
          %835 = vmatprep.subr.mxu0 0.0
          %836 = vmatpush2.msra.mxu0 0.0
          %837 = vmatprep.subr.mxu0 0.0
          %838 = vmatpush2.msra.mxu0 0.0
          %839 = vmatprep.subr.mxu0 0.0
          %840 = vmatpush2.msra.mxu0 0.0
          %841 = vmatprep.subr.mxu0 0.0
          %842 = vmatpush2.msra.mxu0 0.0
          %843 = vmatprep.subr.mxu0 0.0
          %844 = vmatpush2.msra.mxu0 0.0
          %845 = vmatprep.subr.mxu0 0.0
          %846 = vmatpush2.msra.mxu0 0.0
          %847 = vmatprep.subr.mxu0 0.0
          %848 = vmatpush2.msra.mxu0 0.0
          %849 = vmatprep.subr.mxu0 0.0
          %850 = vmatpush2.msra.mxu0 0.0
          %851 = vmatprep.subr.mxu0 0.0
          %852 = vmatpush2.msra.mxu0 0.0
          %853 = vmatprep.subr.mxu0 0.0
          %854 = vmatpush2.msra.mxu0 0.0
          %855 = vmatprep.subr.mxu0 0.0
          %856 = vmatpush2.msra.mxu0 0.0
          %857 = vmatprep.subr.mxu0 0.0
          %858 = vmatpush2.msra.mxu0 0.0
          %859 = vmatprep.subr.mxu0 0.0
          %860 = vmatpush2.msra.mxu0 0.0
          %861 = vmatprep.subr.mxu0 0.0
          %862 = vmatpush2.msra.mxu0 0.0
          %863 = vmatprep.mubr.f32.mxu0 0.0
          %864 = vmatmul.mubr.f32.gmra.mxu0 %v775
          %v865 = vpop.f32.mrf.mxu0
          %v866 = vadd.f32 %v797, %v865
          %v867 = vpop.f32.mrf.mxu0
          %868 = vdwg.mxu0
          %v869 = vld [vmem:[%s408] sm:$0xff]
          %vm870 = vcmp.gt.f32.partialorder %v869, 0.0
          %v871 = vsel %vm870, 0.0, -3.4e+38
          %v872 = vadd.f32 %v866, %v871
          %v873 = vlaneseq
          %v874 = vand.u32 %v873, 127
          %875 = vmax.xlane.f32.xlu0 %v872
          %v876 = vpop.xlane.xlu0 %875
          %vm877 = vcmp.ge.f32.partialorder %v872, %v876
          %v878 = vsel %vm877, %v874, 128
          %v879 = vand.u32 %v878, 65535
          %v880 = vshra.s32 %v878, 16
          %v881 = vcvt.s32.f32 %v879
          %v882 = vcvt.s32.f32 %v880
          %883 = vmin.xlane.f32.xlu0 %v882
          %v884 = vpop.xlane.xlu0 %883
          %vm885 = vcmp.eq.f32.partialorder %v882, %v884
          %v886 = vsel %vm885, %v881, inf
          %887 = vmin.xlane.f32.xlu0 %v886
          %v888 = vpop.xlane.xlu0 %887
          %v889 = vcvt.f32.s32 %v888
          %v890 = vcvt.f32.s32 %v884
          %v891 = vshll.u32 %v890, 16
          %v892 = vadd.s32 %v891, %v889
          %v893 = vld [vmem:[#allocation11] sm:$0xff]
          %v894 = vadd.f32 %v872, %v893
          %895 = vmax.xlane.f32.xlu0 %v894
          %v896 = vpop.xlane.xlu0 %895
          %vm897 = vcmp.ge.f32.partialorder %v894, %v896
          %v898 = vsel %vm897, %v874, 128
          %v899 = vand.u32 %v898, 65535
          %v900 = vshra.s32 %v898, 16
          %v901 = vcvt.s32.f32 %v899
          %v902 = vcvt.s32.f32 %v900
          %903 = vmin.xlane.f32.xlu0 %v902
          %v904 = vpop.xlane.xlu0 %903
          %vm905 = vcmp.eq.f32.partialorder %v902, %v904
          %v906 = vsel %vm905, %v901, inf
          %907 = vmin.xlane.f32.xlu0 %v906
          %v908 = vpop.xlane.xlu0 %907
          %v909 = vcvt.f32.s32 %v908
          %v910 = vcvt.f32.s32 %v904
          %v911 = vshll.u32 %v910, 16
          %v912 = vadd.s32 %v911, %v909
          %vm913 = vcmp.eq.s32.totalorder %v874, 0
          %vm914 = vcmp.eq.s32.totalorder %v874, 1
          %v915 = vsel %vm914, %v892, 0
          %v916 = vsel %vm913, %v912, %v915
          %917 = vst [vmem:[#allocation12] sm:$0xff] %v916
        $region76: #{tpu_custom_call.1} parent=47 // pred_fallthru
          _
        // Predicated region
        $region77: #{tpu_custom_call.1} parent=47 // pred_check
          %p918 = pneg %p225
        $region78: #{tpu_custom_call.1} parent=47 // pred_check_branch
          %920 = sbr.rel (%p918) target = $region80
        $region79: #{tpu_custom_call.1} parent=47 // pred_region
          %s922 = ssub.s32 128, 128
          %923 = vsyncadd [#allocation5], %s922
          %s924 = smul.addr %s30, 128
          %s925 = scalar_lea.hbm %s7, %s924
          %s927 = sshll.u32 [#allocation12], 4
          %s928 = int_to_ptr.vmem [resolvable:$true] %s927
          %930 = dma.vmem_to_hbm [thread:$0]  %s928, 128, %s925, [#allocation5]
        $region80: #{tpu_custom_call.1} parent=47 // pred_fallthru
          _
        // Predicated region
        $region81: #{tpu_custom_call.1} parent=47 // pred_check
          %p931 = pneg %p225
        $region82: #{tpu_custom_call.1} parent=47 // pred_check_branch
          %933 = sbr.rel (%p931) target = $region84
        $region83: #{tpu_custom_call.1} parent=47 // pred_region
          %934 = dma.done [#allocation5], 128
        $region84: #{tpu_custom_call.1} parent=47 // pred_fallthru
          _
      $region48: #{tpu_custom_call.1} parent=5 // pred_fallthru
        _
      %p935 = scmp.le.s32.totalorder 2, %s21
      // Predicated region
      $region85: #{tpu_custom_call.1} parent=5 // pred_check
        %p936 = pneg %p935
      $region86: #{tpu_custom_call.1} parent=5 // pred_check_branch
        %938 = sbr.rel (%p936) target = $region88
      $region87: #{tpu_custom_call.1} parent=5 // pred_region
        %s939 = ssub.s32 %s21, 2
      $region88: #{tpu_custom_call.1} parent=5 // pred_fallthru
        _
    $region6: #{tpu_custom_call.1} parent=1 // loop_footer
      %s25 = sadd.s32 1, %s21
    $region7: #{tpu_custom_call.1} parent=1 // loop_footer_branch
      %20 = sbr.rel target = $region3
    $region8: #{tpu_custom_call.1} parent=1 // loop_exit
      _
    %940 = vsyncpa [#allocation4], 1
    %s941 = scalar_lea.sflag [#allocation4], 1
    %942 = vsyncpa %s941, 1
    %943 = vsyncpa [#allocation7], 1
    %s944 = scalar_lea.sflag [#allocation7], 1
    %945 = vsyncpa %s944, 1
    %946 = vsyncpa [#allocation10], 1
    %947 = vsyncpa [#allocation5], 1
    %s948 = scalar_lea.sflag [#allocation5], 1
    %949 = vsyncpa %s948, 1

</llo_original>
